<compile_context>
chip_gen: v6e
topology: v6e:2x2x1
jax: 0.10.0
libtpu: 0.0.40
codegen_flags: <defaults>
</compile_context>

<pallas_src>
import numpy as np
import jax
import jax.numpy as jnp
from jax.experimental import pallas as pl
from jax.experimental.pallas import tpu as pltpu

# ---- decoder configuration ---------------------------------------------------
B = 2          # real batch
NZ = 16        # latent channels
CNGF = 16      # base width for isize=8
NC = 3         # output image channels
KS = 4         # kernel size
HS = 4         # hidden spatial (4x4 after initial deconv)
OS = 8         # output spatial (8x8 after final stride-2 deconv)
SPATIAL = HS * HS            # 16
HID = CNGF * SPATIAL         # 256
OUT = NC * OS * OS           # 192 (real output width)
OUT_PAD = 256                # lane-dense output width (multiple of 128)
B_PAD = 8                    # sublane-full batch
BN_EPS = 1e-5


# ---------------------------- Pallas kernel ----------------------------------
def decoder_kernel(z_ref, w1_ref, a_ref, gamma_ref, beta_ref, w2_ref, out_ref):
    # layer 1: ConvTranspose2d(nz, cngf, 4, 1, 0) on a 1x1 input == matmul.
    # Kept in f32 (tiny operands; feeds train-mode BN statistics).
    z = z_ref[...]                                            # (B_PAD, NZ)
    h = jnp.dot(z, w1_ref[...],
                preferred_element_type=jnp.float32)           # (B_PAD, HID)

    # BatchNorm2d (training-mode batch statistics, per channel).
    # Zero-padded batch rows contribute exactly 0 to both sums; the 1/n
    # normalization (n = B*SPATIAL over the REAL batch) and the per-channel
    # sum + broadcast-back-to-full-width are baked into the single host-side
    # (HID, HID) averaging matrix A, so BN needs only ONE lane-dense matmul
    # on the MXU instead of lane-sparse XLU reductions.
    col_sum = jnp.sum(h, axis=0, keepdims=True)               # (1, HID) sublane reduce
    col_sum2 = jnp.sum(h * h, axis=0, keepdims=True)          # (1, HID)
    stats = jnp.concatenate([col_sum, col_sum2], axis=0)      # (2, HID)
    full = jnp.dot(stats, a_ref[...],
                   preferred_element_type=jnp.float32)        # (2, HID)
    mean_full = full[0:1, :]                                  # E[x]  per lane
    ex2_full = full[1:2, :]                                   # E[x^2] per lane
    # NOTE: E[x^2]-E[x]^2 can cancel for large activations; fine at the
    # 0.02-scale init used here (matches the module's default numerics).
    var_full = ex2_full - mean_full * mean_full               # biased variance
    inv_full = jax.lax.rsqrt(var_full + BN_EPS)               # EUP

    # Fold BN affine into a single scale/shift -> 2 VPU ops per element of h.
    scale_full = inv_full * gamma_ref[...]                    # (1, HID)
    shift_full = beta_ref[...] - mean_full * scale_full       # (1, HID)
    hn = h * scale_full + shift_full

    # ReLU
    hr = jnp.maximum(hn, 0.0)

    # layer 2: ConvTranspose2d(cngf, nc, 4, 2, 1) folded into a dense matmul.
    # bf16 operands (MXU-native), f32 accumulation; output lane-padded to 256
    # so the store is an unmasked, lane-dense vst.
    o = jnp.dot(hr.astype(jnp.bfloat16), w2_ref[...],
                preferred_element_type=jnp.float32)           # (B_PAD, OUT_PAD)

    # Tanh (f32, EUP)
    out_ref[...] = jnp.tanh(o)


# ------------------------------ wrapper ---------------------------------------
def build_dense_deconv2(w2):
    """Fold ConvTranspose2d(cngf, nc, 4, stride=2, pad=1) into (HID, OUT_PAD).

    Columns [OUT:OUT_PAD) stay zero (lane padding only).
    """
    m = np.zeros((HID, OUT_PAD), np.float32)
    for ci in range(CNGF):
        for ih in range(HS):
            for iw in range(HS):
                row = ci * SPATIAL + ih * HS + iw
                for co in range(NC):
                    for kh in range(KS):
                        for kw in range(KS):
                            oh = 2 * ih - 1 + kh
                            ow = 2 * iw - 1 + kw
                            if 0 <= oh < OS and 0 <= ow < OS:
                                m[row, co * OS * OS + oh * OS + ow] += \
                                    w2[ci, co, kh, kw]
    return m


def build_bn_average_matrix(batch):
    """A[i,j] = 1/(batch*SPATIAL) if columns i,j belong to the same channel."""
    sel = np.zeros((HID, CNGF), np.float32)
    for c in range(CNGF):
        sel[c * SPATIAL:(c + 1) * SPATIAL, c] = 1.0
    return (sel @ sel.T) / np.float32(batch * SPATIAL)        # (HID, HID)


@jax.jit
def netg_forward(z_nchw, w1_flat, a_mat, gamma_full, beta_full, w2_dense):
    b = z_nchw.shape[0]                                       # static under jit
    z = z_nchw.reshape(b, NZ).astype(jnp.float32)
    z_pad = jnp.pad(z, ((0, B_PAD - b), (0, 0)))              # zero rows -> BN-safe
    out_flat = pl.pallas_call(
        decoder_kernel,
        out_shape=jax.ShapeDtypeStruct((B_PAD, OUT_PAD), jnp.float32),
        in_specs=[pl.BlockSpec(memory_space=pltpu.MemorySpace.VMEM)] * 6,
        out_specs=pl.BlockSpec(memory_space=pltpu.MemorySpace.VMEM),
    )(z_pad, w1_flat, a_mat, gamma_full, beta_full, w2_dense)
    # drop batch + lane padding, restore NCHW
    return out_flat[:b, :OUT].reshape(b, NC, OS, OS)


# -------------------------- pure reference (numpy, f32) -----------------------
def ref_decoder(z_nchw, w1, gamma, beta, w2):
    z = np.asarray(z_nchw).reshape(B, NZ)
    h = np.einsum('bi,icxy->bcxy', z, w1)                     # (B, CNGF, 4, 4)
    mean = h.mean(axis=(0, 2, 3), keepdims=True)
    var = h.var(axis=(0, 2, 3), keepdims=True)                # biased
    h = (h - mean) / np.sqrt(var + BN_EPS) * gamma.reshape(1, -1, 1, 1) \
        + beta.reshape(1, -1, 1, 1)
    h = np.maximum(h, 0.0)
    out = np.zeros((B, NC, OS, OS), np.float32)
    for b in range(B):
        for ci in range(CNGF):
            for co in range(NC):
                for ih in range(HS):
                    for iw in range(HS):
                        for kh in range(KS):
                            for kw in range(KS):
                                oh = 2 * ih - 1 + kh
                                ow = 2 * iw - 1 + kw
                                if 0 <= oh < OS and 0 <= ow < OS:
                                    out[b, co, oh, ow] += \
                                        h[b, ci, ih, iw] * w2[ci, co, kh, kw]
    return np.tanh(out)


if __name__ == "__main__":
    key = jax.random.PRNGKey(0)
    k_z, k_w1, k_w2 = jax.random.split(key, 3)

    # latent input, NCHW like the PyTorch module expects
    z = jax.random.normal(k_z, (B, NZ, 1, 1), dtype=jnp.float32)

    # deterministic parameter init (DCGAN-style N(0, 0.02) conv weights,
    # BN gamma=1, beta=0)
    w1 = 0.02 * np.asarray(jax.random.normal(k_w1, (NZ, CNGF, KS, KS)),
                           dtype=np.float32)
    w2 = 0.02 * np.asarray(jax.random.normal(k_w2, (CNGF, NC, KS, KS)),
                           dtype=np.float32)
    gamma = np.ones((CNGF,), np.float32)
    beta = np.zeros((CNGF,), np.float32)

    # host-side parameter packing (glue)
    w1_flat = jnp.asarray(w1.reshape(NZ, HID), dtype=jnp.float32)   # (NZ, HID)
    w2_dense = jnp.asarray(build_dense_deconv2(w2),
                           dtype=jnp.bfloat16)                      # (HID, 256) bf16
    a_mat = jnp.asarray(build_bn_average_matrix(B))                 # (HID, HID) f32
    gamma_full = jnp.asarray(np.repeat(gamma, SPATIAL)[None, :])    # (1, HID)
    beta_full = jnp.asarray(np.repeat(beta, SPATIAL)[None, :])      # (1, HID)

    out = netg_forward(z, w1_flat, a_mat, gamma_full, beta_full, w2_dense)
    out = jax.block_until_ready(out)

    ref = ref_decoder(np.asarray(z), w1, gamma, beta, w2)
    # Dominant second matmul uses bf16 operands (f32 accumulation); BN / tanh
    # remain f32, so a moderately loose tolerance is appropriate.
    np.testing.assert_allclose(np.asarray(out), ref, rtol=2e-2, atol=5e-3)

    print("KERNEL_OK")
</pallas_src>

<mosaic_0001>
module attributes {stable_mosaic.version = 11 : i64} {
  func.func @decoder_kernel(%arg0: memref<8x16xf32, #tpu.memory_space<vmem>>, %arg1: memref<16x256xf32, #tpu.memory_space<vmem>>, %arg2: memref<256x256xf32, #tpu.memory_space<vmem>>, %arg3: memref<1x256xf32, #tpu.memory_space<vmem>>, %arg4: memref<1x256xf32, #tpu.memory_space<vmem>>, %arg5: memref<256x256xbf16, #tpu.memory_space<vmem>>, %arg6: memref<8x256xf32, #tpu.memory_space<vmem>>) attributes {dimension_semantics = [], scalar_prefetch = 0 : i64, scratch_operands = 0 : i64, tpu.core_type = #tpu.core_type<tc>} {
    %c0 = arith.constant 0 : index
    %c0_0 = arith.constant 0 : index
    %0 = vector.load %arg0[%c0, %c0_0] : memref<8x16xf32, #tpu.memory_space<vmem>>, vector<8x16xf32>
    %c0_1 = arith.constant 0 : index
    %c0_2 = arith.constant 0 : index
    %1 = vector.load %arg1[%c0_1, %c0_2] : memref<16x256xf32, #tpu.memory_space<vmem>>, vector<16x256xf32>
    %cst = arith.constant dense<0.000000e+00> : vector<8x256xf32>
    %2 = tpu.matmul %0, %1, %cst {dimension_numbers = #tpu.dot_dimension_numbers<[1], [0], [0], [1], [0, 0, 1, 1], [], []>} : vector<8x16xf32>, vector<16x256xf32>, vector<8x256xf32> -> vector<8x256xf32>
    %cst_3 = arith.constant dense<0.000000e+00> : vector<256xf32>
    %3 = vector.multi_reduction <add>, %2, %cst_3 [0] : vector<8x256xf32> to vector<256xf32>
    %4 = vector.shape_cast %3 : vector<256xf32> to vector<1x256xf32>
    %5 = arith.mulf %2, %2 : vector<8x256xf32>
    %cst_4 = arith.constant dense<0.000000e+00> : vector<256xf32>
    %6 = vector.multi_reduction <add>, %5, %cst_4 [0] : vector<8x256xf32> to vector<256xf32>
    %7 = vector.shape_cast %6 : vector<256xf32> to vector<1x256xf32>
    %8 = tpu.concatenate %4, %7 in 0 : vector<1x256xf32>, vector<1x256xf32> -> vector<2x256xf32>
    %c0_5 = arith.constant 0 : index
    %c0_6 = arith.constant 0 : index
    %9 = vector.load %arg2[%c0_5, %c0_6] : memref<256x256xf32, #tpu.memory_space<vmem>>, vector<256x256xf32>
    %cst_7 = arith.constant dense<0.000000e+00> : vector<2x256xf32>
    %10 = tpu.matmul %8, %9, %cst_7 {dimension_numbers = #tpu.dot_dimension_numbers<[1], [0], [0], [1], [0, 0, 1, 1], [], []>} : vector<2x256xf32>, vector<256x256xf32>, vector<2x256xf32> -> vector<2x256xf32>
    %11 = vector.extract_strided_slice %10 {offsets = [0, 0], sizes = [1, 256], strides = [1, 1]} : vector<2x256xf32> to vector<1x256xf32>
    %12 = vector.extract_strided_slice %10 {offsets = [1, 0], sizes = [1, 256], strides = [1, 1]} : vector<2x256xf32> to vector<1x256xf32>
    %13 = arith.mulf %11, %11 : vector<1x256xf32>
    %14 = arith.subf %12, %13 : vector<1x256xf32>
    %cst_8 = arith.constant 9.99999974E-6 : f32
    %15 = vector.broadcast %cst_8 : f32 to vector<1x256xf32>
    %16 = arith.addf %14, %15 : vector<1x256xf32>
    %17 = math.rsqrt %16 : vector<1x256xf32>
    %c0_9 = arith.constant 0 : index
    %c0_10 = arith.constant 0 : index
    %18 = vector.load %arg3[%c0_9, %c0_10] : memref<1x256xf32, #tpu.memory_space<vmem>>, vector<1x256xf32>
    %19 = arith.mulf %17, %18 : vector<1x256xf32>
    %c0_11 = arith.constant 0 : index
    %c0_12 = arith.constant 0 : index
    %20 = vector.load %arg4[%c0_11, %c0_12] : memref<1x256xf32, #tpu.memory_space<vmem>>, vector<1x256xf32>
    %21 = arith.mulf %11, %19 : vector<1x256xf32>
    %22 = arith.subf %20, %21 : vector<1x256xf32>
    %23 = vector.broadcast %19 : vector<1x256xf32> to vector<8x256xf32>
    %24 = arith.mulf %2, %23 : vector<8x256xf32>
    %25 = vector.broadcast %22 : vector<1x256xf32> to vector<8x256xf32>
    %26 = arith.addf %24, %25 : vector<8x256xf32>
    %cst_13 = arith.constant 0.000000e+00 : f32
    %27 = vector.broadcast %cst_13 : f32 to vector<8x256xf32>
    %28 = arith.maximumf %26, %27 : vector<8x256xf32>
    %29 = arith.truncf %28 : vector<8x256xf32> to vector<8x256xbf16>
    %c0_14 = arith.constant 0 : index
    %c0_15 = arith.constant 0 : index
    %30 = vector.load %arg5[%c0_14, %c0_15] : memref<256x256xbf16, #tpu.memory_space<vmem>>, vector<256x256xbf16>
    %cst_16 = arith.constant dense<0.000000e+00> : vector<8x256xf32>
    %31 = tpu.matmul %29, %30, %cst_16 {dimension_numbers = #tpu.dot_dimension_numbers<[1], [0], [0], [1], [0, 0, 1, 1], [], []>} : vector<8x256xbf16>, vector<256x256xbf16>, vector<8x256xf32> -> vector<8x256xf32>
    %32 = math.tanh %31 : vector<8x256xf32>
    %c0_17 = arith.constant 0 : index
    %c0_18 = arith.constant 0 : index
    %33 = vector.load %arg6[%c0_17, %c0_18] : memref<8x256xf32, #tpu.memory_space<vmem>>, vector<8x256xf32>
    tpu.vector_store %arg6[%c0_17, %c0_18], %32 {strides = array<i32>} : memref<8x256xf32, #tpu.memory_space<vmem>>, vector<8x256xf32>,
    return
  }
}

</mosaic_0001>

<llo_original>
// kernel: netg_forward.1
$region0: #{netg_forward.1}
  #allocation0 [shape = 'u32[]', space=smem, size = 0x4, offset = 0x4, fixed_abs, tag = 'smem constant byte address 0x4 - core index']
  #allocation1 [shape = 'u32[144,128]{1,0:T(1,128)}', space=vmem, size = 0x12000, scoped, tag = 'internal scratch']
  %s0 = inlined_call_operand.vmem [shape: f32[8,16], index: 0, kind: input, shape index: {}]
  %s1 = inlined_call_operand.hbm [shape: f32[16,256], index: 1, kind: input, shape index: {}]
  %s2 = inlined_call_operand.hbm [shape: f32[256,256], index: 2, kind: input, shape index: {}]
  %s3 = inlined_call_operand.vmem [shape: f32[1,256], index: 3, kind: input, shape index: {}]
  %s4 = inlined_call_operand.vmem [shape: f32[1,256], index: 4, kind: input, shape index: {}]
  %s5 = inlined_call_operand.hbm [shape: bf16[256,256], index: 5, kind: input, shape index: {}]
  %s6 = inlined_call_operand.vmem [shape: f32[8,256], index: 6, kind: output, shape index: {}]
  %s7 = sld [smem:[#allocation0]]
  $region46: #{netg_forward.1} parent=0
    _
  %s9 = ssub.s32 1, %s7
  %s10 = scalar_select 0, %s9, %s7
  $region1: #{netg_forward.1} parent=0
    #allocation2 [shape = 'u8[16384]{0}', space=vmem, size = 0x4000, scoped, tag = 'input window, operand 1, single buffered']
    #allocation3 [shape = 's32[1]{0}', space=sflag, size = 0x4, scoped, tag = 'scoped memory for netg_forward.1']
    #allocation4 [shape = 'u8[262144]{0}', space=vmem, size = 0x40000, scoped, tag = 'input window, operand 2, single buffered']
    #allocation5 [shape = 's32[1]{0}', space=sflag, size = 0x4, scoped, tag = 'scoped memory for netg_forward.1']
    #allocation6 [shape = 'u8[131072]{0}', space=vmem, size = 0x20000, scoped, tag = 'input window, operand 5, single buffered']
    %11 = vsyncpa [#allocation3], 0
    %12 = vsyncpa [#allocation5], 0
    // Predicated region
    $region2: #{netg_forward.1} parent=1 // pred_check
      _
    $region3: #{netg_forward.1} parent=1 // pred_check_branch
      %14 = sbr.rel (0) target = $region5
    $region4: #{netg_forward.1} parent=1 // pred_region
      _
    $region5: #{netg_forward.1} parent=1 // pred_fallthru
      _
    // Predicated region
    $region6: #{netg_forward.1} parent=1 // pred_check
      _
    $region7: #{netg_forward.1} parent=1 // pred_check_branch
      %16 = sbr.rel (0) target = $region9
    $region8: #{netg_forward.1} parent=1 // pred_region
      %s18 = ssub.s32 512, 512
      %19 = vsyncadd [#allocation3], %s18
      %s20 = sshll.u32 [#allocation2], 4
      %s21 = int_to_ptr.vmem [resolvable:$true] %s20
      %26 = dma.hbm_to_vmem [thread:$0]  %s1, 512, %s21, [#allocation3], 256, 256, 16
    $region9: #{netg_forward.1} parent=1 // pred_fallthru
      _
    // Predicated region
    $region10: #{netg_forward.1} parent=1 // pred_check
      _
    $region11: #{netg_forward.1} parent=1 // pred_check_branch
      %28 = sbr.rel (0) target = $region13
    $region12: #{netg_forward.1} parent=1 // pred_region
      %s30 = ssub.s32 8192, 8192
      %31 = vsyncadd [#allocation5], %s30
      %s32 = sshll.u32 [#allocation4], 4
      %s33 = int_to_ptr.vmem [resolvable:$true] %s32
      %38 = dma.hbm_to_vmem [thread:$0]  %s2, 8192, %s33, [#allocation5], 256, 256, 16
    $region13: #{netg_forward.1} parent=1 // pred_fallthru
      _
    // Predicated region
    $region14: #{netg_forward.1} parent=1 // pred_check
      _
    $region15: #{netg_forward.1} parent=1 // pred_check_branch
      %40 = sbr.rel (0) target = $region17
    $region16: #{netg_forward.1} parent=1 // pred_region
      _
    $region17: #{netg_forward.1} parent=1 // pred_fallthru
      _
    // Predicated region
    $region18: #{netg_forward.1} parent=1 // pred_check
      _
    $region19: #{netg_forward.1} parent=1 // pred_check_branch
      %42 = sbr.rel (0) target = $region21
    $region20: #{netg_forward.1} parent=1 // pred_region
      _
    $region21: #{netg_forward.1} parent=1 // pred_fallthru
      _
    // Predicated region
    $region22: #{netg_forward.1} parent=1 // pred_check
      _
    $region23: #{netg_forward.1} parent=1 // pred_check_branch
      %44 = sbr.rel (0) target = $region25
    $region24: #{netg_forward.1} parent=1 // pred_region
      %s46 = ssub.s32 4096, 4096
      %47 = vsyncadd [#allocation5], %s46
      %s48 = sshll.u32 [#allocation6], 4
      %s49 = int_to_ptr.vmem [resolvable:$true] %s48
      %54 = dma.hbm_to_vmem [thread:$0]  %s5, 4096, %s49, [#allocation5], 128, 128, 8
    $region25: #{netg_forward.1} parent=1 // pred_fallthru
      _
    // Predicated region
    $region26: #{netg_forward.1} parent=1 // pred_check
      _
    $region27: #{netg_forward.1} parent=1 // pred_check_branch
      %56 = sbr.rel (0) target = $region29
    $region28: #{netg_forward.1} parent=1 // pred_region
      %57 = dma.done [#allocation3], 512
    $region29: #{netg_forward.1} parent=1 // pred_fallthru
      _
    // Predicated region
    $region30: #{netg_forward.1} parent=1 // pred_check
      _
    $region31: #{netg_forward.1} parent=1 // pred_check_branch
      %59 = sbr.rel (0) target = $region33
    $region32: #{netg_forward.1} parent=1 // pred_region
      %60 = dma.done [#allocation5], 8192
    $region33: #{netg_forward.1} parent=1 // pred_fallthru
      _
    // Predicated region
    $region34: #{netg_forward.1} parent=1 // pred_check
      _
    $region35: #{netg_forward.1} parent=1 // pred_check_branch
      %62 = sbr.rel (0) target = $region37
    $region36: #{netg_forward.1} parent=1 // pred_region
      %63 = dma.done [#allocation5], 4096
    $region37: #{netg_forward.1} parent=1 // pred_fallthru
      _
    %v64 = vld [vmem:[%s0] sm:$0xff]
    %v65 = vld [vmem:[#allocation2] sm:$0xff]
    %v66 = vld [vmem:[#allocation2 + $0x8] sm:$0xff]
    %v67 = vld [vmem:[#allocation2 + $0x10] sm:$0xff]
    %v68 = vld [vmem:[#allocation2 + $0x18] sm:$0xff]
    %vm69 = vcmask 130048
    %v71 = vsel %vm69, %v64, 0
    %73 = vmatprep.subr.mxu0 0.0
    %74 = vmatpush1.msra.mxu0 0.0
    %75 = vmatprep.subr.mxu0 0.0
    %76 = vmatpush1.msra.mxu0 0.0
    %77 = vmatprep.subr.mxu0 0.0
    %78 = vmatpush1.msra.mxu0 0.0
    %79 = vmatprep.subr.mxu0 0.0
    %80 = vmatpush1.msra.mxu0 0.0
    %81 = vmatprep.subr.mxu0 0.0
    %82 = vmatpush1.msra.mxu0 0.0
    %83 = vmatprep.subr.mxu0 0.0
    %84 = vmatpush1.msra.mxu0 0.0
    %85 = vmatprep.subr.mxu0 0.0
    %86 = vmatpush1.msra.mxu0 0.0
    %87 = vmatprep.subr.mxu0 0.0
    %88 = vmatpush1.msra.mxu0 0.0
    %89 = vmatprep.subr.mxu0 0.0
    %90 = vmatpush1.msra.mxu0 0.0
    %91 = vmatprep.subr.mxu0 0.0
    %92 = vmatpush1.msra.mxu0 0.0
    %93 = vmatprep.subr.mxu0 0.0
    %94 = vmatpush1.msra.mxu0 0.0
    %95 = vmatprep.subr.mxu0 0.0
    %96 = vmatpush1.msra.mxu0 0.0
    %97 = vmatprep.subr.mxu0 0.0
    %98 = vmatpush1.msra.mxu0 0.0
    %99 = vmatprep.subr.mxu0 0.0
    %100 = vmatpush1.msra.mxu0 0.0
    %101 = vmatprep.subr.mxu0 %v68
    %102 = vmatpush1.msra.mxu0 %v67
    %103 = vmatprep.subr.mxu0 %v66
    %104 = vmatpush1.msra.mxu0 %v65
    %105 = vmatprep.subr.mxu0 0.0
    %106 = vmatpush2.msra.mxu0 0.0
    %107 = vmatprep.subr.mxu0 0.0
    %108 = vmatpush2.msra.mxu0 0.0
    %109 = vmatprep.subr.mxu0 0.0
    %110 = vmatpush2.msra.mxu0 0.0
    %111 = vmatprep.subr.mxu0 0.0
    %112 = vmatpush2.msra.mxu0 0.0
    %113 = vmatprep.subr.mxu0 0.0
    %114 = vmatpush2.msra.mxu0 0.0
    %115 = vmatprep.subr.mxu0 0.0
    %116 = vmatpush2.msra.mxu0 0.0
    %117 = vmatprep.subr.mxu0 0.0
    %118 = vmatpush2.msra.mxu0 0.0
    %119 = vmatprep.subr.mxu0 0.0
    %120 = vmatpush2.msra.mxu0 0.0
    %121 = vmatprep.subr.mxu0 0.0
    %122 = vmatpush2.msra.mxu0 0.0
    %123 = vmatprep.subr.mxu0 0.0
    %124 = vmatpush2.msra.mxu0 0.0
    %125 = vmatprep.subr.mxu0 0.0
    %126 = vmatpush2.msra.mxu0 0.0
    %127 = vmatprep.subr.mxu0 0.0
    %128 = vmatpush2.msra.mxu0 0.0
    %129 = vmatprep.subr.mxu0 0.0
    %130 = vmatpush2.msra.mxu0 0.0
    %131 = vmatprep.subr.mxu0 0.0
    %132 = vmatpush2.msra.mxu0 0.0
    %133 = vmatprep.subr.mxu0 0.0
    %134 = vmatpush2.msra.mxu0 0.0
    %135 = vmatprep.subr.mxu0 0.0
    %136 = vmatpush2.msra.mxu0 0.0
    %137 = vmatprep.mubr.f32.mxu0 0.0
    %138 = vmatmul.mubr.f32.gmra.mxu0 %v71
    %v139 = vpop.f32.mrf.mxu0
    %v140 = vadd.f32 0.0, %v139
    %v141 = vpop.f32.mrf.mxu0
    %v142 = vadd.f32 0.0, %v141
    %143 = vdwg.mxu0
    %v144 = vrot.slane %v140, 4
    %v145 = vadd.f32 %v140, %v144
    %v146 = vrot.slane %v145, 2
    %v147 = vadd.f32 %v145, %v146
    %v148 = vrot.slane %v147, 1
    %v149 = vadd.f32 %v147, %v148
    %v150 = vrot.slane %v142, 4
    %v151 = vadd.f32 %v142, %v150
    %v152 = vrot.slane %v151, 2
    %v153 = vadd.f32 %v151, %v152
    %v154 = vrot.slane %v153, 1
    %v155 = vadd.f32 %v153, %v154
    %v156 = vmul.f32 %v140, %v140
    %v157 = vmul.f32 %v142, %v142
    %v158 = vrot.slane %v156, 4
    %v159 = vadd.f32 %v156, %v158
    %v160 = vrot.slane %v159, 2
    %v161 = vadd.f32 %v159, %v160
    %v162 = vrot.slane %v161, 1
    %v163 = vadd.f32 %v161, %v162
    %v164 = vrot.slane %v157, 4
    %v165 = vadd.f32 %v157, %v164
    %v166 = vrot.slane %v165, 2
    %v167 = vadd.f32 %v165, %v166
    %v168 = vrot.slane %v167, 1
    %v169 = vadd.f32 %v167, %v168
    %vm170 = vcmask 1040384
    %v171 = vsel %vm170, %v149, %v163
    %v172 = vsel %vm170, %v155, %v169
    %v173 = vld [vmem:[#allocation4] sm:$0xff]
    %v174 = vld [vmem:[#allocation4 + $0x8] sm:$0xff]
    %v175 = vld [vmem:[#allocation4 + $0x10] sm:$0xff]
    %v176 = vld [vmem:[#allocation4 + $0x18] sm:$0xff]
    %v177 = vld [vmem:[#allocation4 + $0x20] sm:$0xff]
    %v178 = vld [vmem:[#allocation4 + $0x28] sm:$0xff]
    %v179 = vld [vmem:[#allocation4 + $0x30] sm:$0xff]
    %v180 = vld [vmem:[#allocation4 + $0x38] sm:$0xff]
    %v181 = vld [vmem:[#allocation4 + $0x40] sm:$0xff]
    %v182 = vld [vmem:[#allocation4 + $0x48] sm:$0xff]
    %v183 = vld [vmem:[#allocation4 + $0x50] sm:$0xff]
    %v184 = vld [vmem:[#allocation4 + $0x58] sm:$0xff]
    %v185 = vld [vmem:[#allocation4 + $0x60] sm:$0xff]
    %v186 = vld [vmem:[#allocation4 + $0x68] sm:$0xff]
    %v187 = vld [vmem:[#allocation4 + $0x70] sm:$0xff]
    %v188 = vld [vmem:[#allocation4 + $0x78] sm:$0xff]
    %v189 = vld [vmem:[#allocation4 + $0x80] sm:$0xff]
    %v190 = vld [vmem:[#allocation4 + $0x88] sm:$0xff]
    %v191 = vld [vmem:[#allocation4 + $0x90] sm:$0xff]
    %v192 = vld [vmem:[#allocation4 + $0x98] sm:$0xff]
    %v193 = vld [vmem:[#allocation4 + $0xa0] sm:$0xff]
    %v194 = vld [vmem:[#allocation4 + $0xa8] sm:$0xff]
    %v195 = vld [vmem:[#allocation4 + $0xb0] sm:$0xff]
    %v196 = vld [vmem:[#allocation4 + $0xb8] sm:$0xff]
    %v197 = vld [vmem:[#allocation4 + $0xc0] sm:$0xff]
    %v198 = vld [vmem:[#allocation4 + $0xc8] sm:$0xff]
    %v199 = vld [vmem:[#allocation4 + $0xd0] sm:$0xff]
    %v200 = vld [vmem:[#allocation4 + $0xd8] sm:$0xff]
    %v201 = vld [vmem:[#allocation4 + $0xe0] sm:$0xff]
    %v202 = vld [vmem:[#allocation4 + $0xe8] sm:$0xff]
    %v203 = vld [vmem:[#allocation4 + $0xf0] sm:$0xff]
    %v204 = vld [vmem:[#allocation4 + $0xf8] sm:$0xff]
    %v205 = vld [vmem:[#allocation4 + $0x100] sm:$0xff]
    %v206 = vld [vmem:[#allocation4 + $0x108] sm:$0xff]
    %v207 = vld [vmem:[#allocation4 + $0x110] sm:$0xff]
    %v208 = vld [vmem:[#allocation4 + $0x118] sm:$0xff]
    %v209 = vld [vmem:[#allocation4 + $0x120] sm:$0xff]
    %v210 = vld [vmem:[#allocation4 + $0x128] sm:$0xff]
    %v211 = vld [vmem:[#allocation4 + $0x130] sm:$0xff]
    %v212 = vld [vmem:[#allocation4 + $0x138] sm:$0xff]
    %v213 = vld [vmem:[#allocation4 + $0x140] sm:$0xff]
    %v214 = vld [vmem:[#allocation4 + $0x148] sm:$0xff]
    %v215 = vld [vmem:[#allocation4 + $0x150] sm:$0xff]
    %v216 = vld [vmem:[#allocation4 + $0x158] sm:$0xff]
    %v217 = vld [vmem:[#allocation4 + $0x160] sm:$0xff]
    %v218 = vld [vmem:[#allocation4 + $0x168] sm:$0xff]
    %v219 = vld [vmem:[#allocation4 + $0x170] sm:$0xff]
    %v220 = vld [vmem:[#allocation4 + $0x178] sm:$0xff]
    %v221 = vld [vmem:[#allocation4 + $0x180] sm:$0xff]
    %v222 = vld [vmem:[#allocation4 + $0x188] sm:$0xff]
    %v223 = vld [vmem:[#allocation4 + $0x190] sm:$0xff]
    %v224 = vld [vmem:[#allocation4 + $0x198] sm:$0xff]
    %v225 = vld [vmem:[#allocation4 + $0x1a0] sm:$0xff]
    %v226 = vld [vmem:[#allocation4 + $0x1a8] sm:$0xff]
    %v227 = vld [vmem:[#allocation4 + $0x1b0] sm:$0xff]
    %v228 = vld [vmem:[#allocation4 + $0x1b8] sm:$0xff]
    %v229 = vld [vmem:[#allocation4 + $0x1c0] sm:$0xff]
    %v230 = vld [vmem:[#allocation4 + $0x1c8] sm:$0xff]
    %v231 = vld [vmem:[#allocation4 + $0x1d0] sm:$0xff]
    %v232 = vld [vmem:[#allocation4 + $0x1d8] sm:$0xff]
    %v233 = vld [vmem:[#allocation4 + $0x1e0] sm:$0xff]
    %v234 = vld [vmem:[#allocation4 + $0x1e8] sm:$0xff]
    %v235 = vld [vmem:[#allocation4 + $0x1f0] sm:$0xff]
    %v236 = vld [vmem:[#allocation4 + $0x1f8] sm:$0xff]
    %237 = vmatprep.subr.mxu0 %v204
    %238 = vmatpush1.msra.mxu0 %v203
    %239 = vmatprep.subr.mxu0 %v202
    %240 = vmatpush1.msra.mxu0 %v201
    %241 = vmatprep.subr.mxu0 %v200
    %242 = vmatpush1.msra.mxu0 %v199
    %243 = vmatprep.subr.mxu0 %v198
    %244 = vmatpush1.msra.mxu0 %v197
    %245 = vmatprep.subr.mxu0 %v196
    %246 = vmatpush1.msra.mxu0 %v195
    %247 = vmatprep.subr.mxu0 %v194
    %248 = vmatpush1.msra.mxu0 %v193
    %249 = vmatprep.subr.mxu0 %v192
    %250 = vmatpush1.msra.mxu0 %v191
    %251 = vmatprep.subr.mxu0 %v190
    %252 = vmatpush1.msra.mxu0 %v189
    %253 = vmatprep.subr.mxu0 %v188
    %254 = vmatpush1.msra.mxu0 %v187
    %255 = vmatprep.subr.mxu0 %v186
    %256 = vmatpush1.msra.mxu0 %v185
    %257 = vmatprep.subr.mxu0 %v184
    %258 = vmatpush1.msra.mxu0 %v183
    %259 = vmatprep.subr.mxu0 %v182
    %260 = vmatpush1.msra.mxu0 %v181
    %261 = vmatprep.subr.mxu0 %v180
    %262 = vmatpush1.msra.mxu0 %v179
    %263 = vmatprep.subr.mxu0 %v178
    %264 = vmatpush1.msra.mxu0 %v177
    %265 = vmatprep.subr.mxu0 %v176
    %266 = vmatpush1.msra.mxu0 %v175
    %267 = vmatprep.subr.mxu0 %v174
    %268 = vmatpush1.msra.mxu0 %v173
    %269 = vmatprep.subr.mxu0 %v236
    %270 = vmatpush2.msra.mxu0 %v235
    %271 = vmatprep.subr.mxu0 %v234
    %272 = vmatpush2.msra.mxu0 %v233
    %273 = vmatprep.subr.mxu0 %v232
    %274 = vmatpush2.msra.mxu0 %v231
    %275 = vmatprep.subr.mxu0 %v230
    %276 = vmatpush2.msra.mxu0 %v229
    %277 = vmatprep.subr.mxu0 %v228
    %278 = vmatpush2.msra.mxu0 %v227
    %279 = vmatprep.subr.mxu0 %v226
    %280 = vmatpush2.msra.mxu0 %v225
    %281 = vmatprep.subr.mxu0 %v224
    %282 = vmatpush2.msra.mxu0 %v223
    %283 = vmatprep.subr.mxu0 %v222
    %284 = vmatpush2.msra.mxu0 %v221
    %285 = vmatprep.subr.mxu0 %v220
    %286 = vmatpush2.msra.mxu0 %v219
    %287 = vmatprep.subr.mxu0 %v218
    %288 = vmatpush2.msra.mxu0 %v217
    %289 = vmatprep.subr.mxu0 %v216
    %290 = vmatpush2.msra.mxu0 %v215
    %291 = vmatprep.subr.mxu0 %v214
    %292 = vmatpush2.msra.mxu0 %v213
    %293 = vmatprep.subr.mxu0 %v212
    %294 = vmatpush2.msra.mxu0 %v211
    %295 = vmatprep.subr.mxu0 %v210
    %296 = vmatpush2.msra.mxu0 %v209
    %297 = vmatprep.subr.mxu0 %v208
    %298 = vmatpush2.msra.mxu0 %v207
    %299 = vmatprep.subr.mxu0 %v206
    %300 = vmatpush2.msra.mxu0 %v205
    %301 = vmatprep.mubr.f32.mxu0 %v172
    %302 = vmatmul.mubr.f32.gmra.mxu0 %v171
    %v303 = vpop.f32.mrf.mxu0
    %v304 = vadd.f32 0.0, %v303
    %v305 = vpop.f32.mrf.mxu0
    %v306 = vadd.f32 0.0, %v305
    %307 = vdwg.mxu0
    %v308 = vmul.f32 %v304, %v304
    %v309 = vmul.f32 %v306, %v306
    %v312 = vrot.slane %v308, 7
    %v313 = vrot.slane %v309, 7
    %v316 = vsub.f32 %v304, %v312
    %v317 = vsub.f32 %v306, %v313
    %v318 = vadd.f32 %v316, 1e-05
    %v319 = vadd.f32 %v317, 1e-05
    %v320 = vrsqrt.pop %v318
    %v321 = vrsqrt.pop %v319
    %v322 = vld [vmem:[%s3] sm:$0x3]
    %v324 = vlaneseq
    %v325 = vshrl.u32 %v324, 7
    %v326 = vsub.s32 0, %v325
    %v327 = vrot.slane %v322, %v326
    %v328 = vlaneseq
    %v329 = vshrl.u32 %v328, 7
    %v330 = vsub.s32 1, %v329
    %v331 = vrot.slane %v322, %v330
    %v334 = vmul.f32 %v320, %v327
    %v335 = vmul.f32 %v321, %v331
    %v336 = vld [vmem:[%s4] sm:$0x3]
    %v339 = vrot.slane %v334, 1
    %v340 = vrot.slane %v335, 1
    %v343 = vmul.f32 %v304, %v339
    %v344 = vmul.f32 %v306, %v340
    %v347 = vcombine.low %v343, %v344
    %v349 = vunpack.c.l.s4 1966171168
    %v350 = vunpack.c.0.s8 %v349
    %v351 = vlaneseq
    %v352 = vshrl.u32 %v351, 7
    %v353 = vsub.s32 %v350, %v352
    %v354 = vrot.slane %v347, %v353
    %v356 = vunpack.c.l.s4 1966171168
    %v357 = vunpack.c.0.s8 %v356
    %v358 = vlaneseq
    %v359 = vshrl.u32 %v358, 7
    %v360 = vsub.s32 %v357, %v359
    %v361 = vrot.slane %v354, %v360
    %v363 = vsub.f32 %v336, %v361
    %v364 = vlaneseq
    %v365 = vshrl.u32 %v364, 7
    %v366 = vsub.s32 1, %v365
    %v367 = vrot.slane %v334, %v366
    %v368 = vlaneseq
    %v369 = vshrl.u32 %v368, 7
    %v370 = vsub.s32 1, %v369
    %v371 = vrot.slane %v335, %v370
    %v372 = vmul.f32 %v140, %v367
    %v373 = vmul.f32 %v142, %v371
    %v375 = vlaneseq
    %v376 = vshrl.u32 %v375, 7
    %v377 = vsub.s32 0, %v376
    %v378 = vrot.slane %v363, %v377
    %v379 = vlaneseq
    %v380 = vshrl.u32 %v379, 7
    %v381 = vsub.s32 1, %v380
    %v382 = vrot.slane %v363, %v381
    %v385 = vadd.f32 %v372, %v378
    %v386 = vadd.f32 %v373, %v382
    %v387 = vmax.f32 %v385, 0.0
    %v388 = vmax.f32 %v386, 0.0
    %v389 = vpack.c.bf16 %v387, %v387
    %v390 = vpack.c.bf16 %v388, %v388
    %v391 = vld [vmem:[#allocation6] sm:$0xff]
    %v392 = vld [vmem:[#allocation6 + $0x8] sm:$0xff]
    %v393 = vld [vmem:[#allocation6 + $0x10] sm:$0xff]
    %v394 = vld [vmem:[#allocation6 + $0x18] sm:$0xff]
    %v395 = vld [vmem:[#allocation6 + $0x20] sm:$0xff]
    %v396 = vld [vmem:[#allocation6 + $0x28] sm:$0xff]
    %v397 = vld [vmem:[#allocation6 + $0x30] sm:$0xff]
    %v398 = vld [vmem:[#allocation6 + $0x38] sm:$0xff]
    %v399 = vld [vmem:[#allocation6 + $0x40] sm:$0xff]
    %v400 = vld [vmem:[#allocation6 + $0x48] sm:$0xff]
    %v401 = vld [vmem:[#allocation6 + $0x50] sm:$0xff]
    %v402 = vld [vmem:[#allocation6 + $0x58] sm:$0xff]
    %v403 = vld [vmem:[#allocation6 + $0x60] sm:$0xff]
    %v404 = vld [vmem:[#allocation6 + $0x68] sm:$0xff]
    %v405 = vld [vmem:[#allocation6 + $0x70] sm:$0xff]
    %v406 = vld [vmem:[#allocation6 + $0x78] sm:$0xff]
    %v407 = vld [vmem:[#allocation6 + $0x80] sm:$0xff]
    %v408 = vld [vmem:[#allocation6 + $0x88] sm:$0xff]
    %v409 = vld [vmem:[#allocation6 + $0x90] sm:$0xff]
    %v410 = vld [vmem:[#allocation6 + $0x98] sm:$0xff]
    %v411 = vld [vmem:[#allocation6 + $0xa0] sm:$0xff]
    %v412 = vld [vmem:[#allocation6 + $0xa8] sm:$0xff]
    %v413 = vld [vmem:[#allocation6 + $0xb0] sm:$0xff]
    %v414 = vld [vmem:[#allocation6 + $0xb8] sm:$0xff]
    %v415 = vld [vmem:[#allocation6 + $0xc0] sm:$0xff]
    %v416 = vld [vmem:[#allocation6 + $0xc8] sm:$0xff]
    %v417 = vld [vmem:[#allocation6 + $0xd0] sm:$0xff]
    %v418 = vld [vmem:[#allocation6 + $0xd8] sm:$0xff]
    %v419 = vld [vmem:[#allocation6 + $0xe0] sm:$0xff]
    %v420 = vld [vmem:[#allocation6 + $0xe8] sm:$0xff]
    %v421 = vld [vmem:[#allocation6 + $0xf0] sm:$0xff]
    %v422 = vld [vmem:[#allocation6 + $0xf8] sm:$0xff]
    %v455 = vunpack.c.l.b16 %v391
    %v456 = vunpack.c.h.b16 %v391
    %v457 = vunpack.c.l.b16 %v392
    %v458 = vunpack.c.h.b16 %v392
    %v459 = vunpack.c.l.b16 %v393
    %v460 = vunpack.c.h.b16 %v393
    %v461 = vunpack.c.l.b16 %v394
    %v462 = vunpack.c.h.b16 %v394
    %v463 = vunpack.c.l.b16 %v395
    %v464 = vunpack.c.h.b16 %v395
    %v465 = vunpack.c.l.b16 %v396
    %v466 = vunpack.c.h.b16 %v396
    %v467 = vunpack.c.l.b16 %v397
    %v468 = vunpack.c.h.b16 %v397
    %v469 = vunpack.c.l.b16 %v398
    %v470 = vunpack.c.h.b16 %v398
    %v471 = vunpack.c.l.b16 %v399
    %v472 = vunpack.c.h.b16 %v399
    %v473 = vunpack.c.l.b16 %v400
    %v474 = vunpack.c.h.b16 %v400
    %v475 = vunpack.c.l.b16 %v401
    %v476 = vunpack.c.h.b16 %v401
    %v477 = vunpack.c.l.b16 %v402
    %v478 = vunpack.c.h.b16 %v402
    %v479 = vunpack.c.l.b16 %v403
    %v480 = vunpack.c.h.b16 %v403
    %v481 = vunpack.c.l.b16 %v404
    %v482 = vunpack.c.h.b16 %v404
    %v483 = vunpack.c.l.b16 %v405
    %v484 = vunpack.c.h.b16 %v405
    %v485 = vunpack.c.l.b16 %v406
    %v486 = vunpack.c.h.b16 %v406
    %v487 = vunpack.c.l.b16 %v407
    %v488 = vunpack.c.h.b16 %v407
    %v489 = vunpack.c.l.b16 %v408
    %v490 = vunpack.c.h.b16 %v408
    %v491 = vunpack.c.l.b16 %v409
    %v492 = vunpack.c.h.b16 %v409
    %v493 = vunpack.c.l.b16 %v410
    %v494 = vunpack.c.h.b16 %v410
    %v495 = vunpack.c.l.b16 %v411
    %v496 = vunpack.c.h.b16 %v411
    %v497 = vunpack.c.l.b16 %v412
    %v498 = vunpack.c.h.b16 %v412
    %v499 = vunpack.c.l.b16 %v413
    %v500 = vunpack.c.h.b16 %v413
    %v501 = vunpack.c.l.b16 %v414
    %v502 = vunpack.c.h.b16 %v414
    %v503 = vunpack.c.l.b16 %v415
    %v504 = vunpack.c.h.b16 %v415
    %v505 = vunpack.c.l.b16 %v416
    %v506 = vunpack.c.h.b16 %v416
    %v507 = vunpack.c.l.b16 %v417
    %v508 = vunpack.c.h.b16 %v417
    %v509 = vunpack.c.l.b16 %v418
    %v510 = vunpack.c.h.b16 %v418
    %v511 = vunpack.c.l.b16 %v419
    %v512 = vunpack.c.h.b16 %v419
    %v513 = vunpack.c.l.b16 %v420
    %v514 = vunpack.c.h.b16 %v420
    %v515 = vunpack.c.l.b16 %v421
    %v516 = vunpack.c.h.b16 %v421
    %v517 = vunpack.c.l.b16 %v422
    %v518 = vunpack.c.h.b16 %v422
    %v519 = vpack.c.b16 %v457, %v455
    %v520 = vpack.c.b16 %v458, %v456
    %v521 = vpack.c.b16 %v461, %v459
    %v522 = vpack.c.b16 %v462, %v460
    %v523 = vpack.c.b16 %v465, %v463
    %v524 = vpack.c.b16 %v466, %v464
    %v525 = vpack.c.b16 %v469, %v467
    %v526 = vpack.c.b16 %v470, %v468
    %v527 = vpack.c.b16 %v473, %v471
    %v528 = vpack.c.b16 %v474, %v472
    %v529 = vpack.c.b16 %v477, %v475
    %v530 = vpack.c.b16 %v478, %v476
    %v531 = vpack.c.b16 %v481, %v479
    %v532 = vpack.c.b16 %v482, %v480
    %v533 = vpack.c.b16 %v485, %v483
    %v534 = vpack.c.b16 %v486, %v484
    %v535 = vpack.c.b16 %v489, %v487
    %v536 = vpack.c.b16 %v490, %v488
    %v537 = vpack.c.b16 %v493, %v491
    %v538 = vpack.c.b16 %v494, %v492
    %v539 = vpack.c.b16 %v497, %v495
    %v540 = vpack.c.b16 %v498, %v496
    %v541 = vpack.c.b16 %v501, %v499
    %v542 = vpack.c.b16 %v502, %v500
    %v543 = vpack.c.b16 %v505, %v503
    %v544 = vpack.c.b16 %v506, %v504
    %v545 = vpack.c.b16 %v509, %v507
    %v546 = vpack.c.b16 %v510, %v508
    %v547 = vpack.c.b16 %v513, %v511
    %v548 = vpack.c.b16 %v514, %v512
    %v549 = vpack.c.b16 %v517, %v515
    %v550 = vpack.c.b16 %v518, %v516
    %583 = vmatprep.subr.bf16.mxu0 %v534
    %584 = vmatpush1.bf16.msra.mxu0 %v533
    %585 = vmatprep.subr.bf16.mxu0 %v532
    %586 = vmatpush1.bf16.msra.mxu0 %v531
    %587 = vmatprep.subr.bf16.mxu0 %v530
    %588 = vmatpush1.bf16.msra.mxu0 %v529
    %589 = vmatprep.subr.bf16.mxu0 %v528
    %590 = vmatpush1.bf16.msra.mxu0 %v527
    %591 = vmatprep.subr.bf16.mxu0 %v526
    %592 = vmatpush1.bf16.msra.mxu0 %v525
    %593 = vmatprep.subr.bf16.mxu0 %v524
    %594 = vmatpush1.bf16.msra.mxu0 %v523
    %595 = vmatprep.subr.bf16.mxu0 %v522
    %596 = vmatpush1.bf16.msra.mxu0 %v521
    %597 = vmatprep.subr.bf16.mxu0 %v520
    %598 = vmatpush1.bf16.msra.mxu0 %v519
    %599 = vmatprep.subr.bf16.mxu0 %v550
    %600 = vmatpush2.bf16.msra.mxu0 %v549
    %601 = vmatprep.subr.bf16.mxu0 %v548
    %602 = vmatpush2.bf16.msra.mxu0 %v547
    %603 = vmatprep.subr.bf16.mxu0 %v546
    %604 = vmatpush2.bf16.msra.mxu0 %v545
    %605 = vmatprep.subr.bf16.mxu0 %v544
    %606 = vmatpush2.bf16.msra.mxu0 %v543
    %607 = vmatprep.subr.bf16.mxu0 %v542
    %608 = vmatpush2.bf16.msra.mxu0 %v541
    %609 = vmatprep.subr.bf16.mxu0 %v540
    %610 = vmatpush2.bf16.msra.mxu0 %v539
    %611 = vmatprep.subr.bf16.mxu0 %v538
    %612 = vmatpush2.bf16.msra.mxu0 %v537
    %613 = vmatprep.subr.bf16.mxu0 %v536
    %614 = vmatpush2.bf16.msra.mxu0 %v535
    %615 = vmatprep.mubr.bf16.mxu0 %v390
    %616 = vmatmul.mubr.bf16.gmra.mxu0 %v389
    %v617 = vpop.f32.mrf.mxu0
    %v618 = vadd.f32 0.0, %v617
    %v619 = vpop.f32.mrf.mxu0
    %v620 = vadd.f32 0.0, %v619
    %v621 = vpop.f32.mrf.mxu0
    %v622 = vpop.f32.mrf.mxu0
    %623 = vdwg.mxu0
    %v624 = vtanh.pop %v618
    %v625 = vtanh.pop %v620
    %626 = vst [vmem:[%s6] sm:$0xff] %v624
    %627 = vst [vmem:[%s6 + $0x8] sm:$0xff] %v625
    // Predicated region
    $region38: #{netg_forward.1} parent=1 // pred_check
      _
    $region39: #{netg_forward.1} parent=1 // pred_check_branch
      %629 = sbr.rel (0) target = $region41
    $region40: #{netg_forward.1} parent=1 // pred_region
      _
    $region41: #{netg_forward.1} parent=1 // pred_fallthru
      _
    // Predicated region
    $region42: #{netg_forward.1} parent=1 // pred_check
      _
    $region43: #{netg_forward.1} parent=1 // pred_check_branch
      %631 = sbr.rel (0) target = $region45
    $region44: #{netg_forward.1} parent=1 // pred_region
      _
    $region45: #{netg_forward.1} parent=1 // pred_fallthru
      _
    %632 = vsyncpa [#allocation3], 1
    %633 = vsyncpa [#allocation5], 1

</llo_original>
